<compile_context>
chip_gen: v7x
topology: tpu7x:2x2x1
jax: 0.10.0
libtpu: 0.0.40
codegen_flags: <defaults>
</compile_context>

<pallas_src>
import functools

import jax
import jax.numpy as jnp
from jax.experimental import pallas as pl
from jax.experimental.pallas import tpu as pltpu


def _mlp_kernel(xTa_ref, w1a_ref, w2_ref, b2_ref, out_ref):
    # linear1 (transposed space, bias folded): (hidden, in+1) @ (in+1, TB)
    h = jnp.dot(w1a_ref[...], xTa_ref[...], preferred_element_type=jnp.float32)
    # torch.sigmoid -> EUP path, no VALU divide
    s = jax.nn.sigmoid(h)
    # linear2 (transposed space): (out, hidden) @ (hidden, TB)
    o = jnp.dot(w2_ref[...], s, preferred_element_type=jnp.float32)
    # b2 is (out, 1): one lane-broadcast add fused with the store cast
    out_ref[...] = (o + b2_ref[...]).astype(out_ref.dtype)


@functools.partial(jax.jit, static_argnames=("max_tb",))
def nn_forward(x, w1, b1, w2, b2, *, max_tb=2048):
    """Forward of the 1-hidden-layer MLP.

    x : (B, in)          row-major, same as the PyTorch module input
    w1: (hidden, in)     PyTorch nn.Linear weight layout
    b1: (hidden,)
    w2: (out, hidden)
    b2: (out,)
    returns (B, out)
    """
    B, in_size = x.shape
    hidden = w1.shape[0]
    out_size = w2.shape[0]

    # Adaptive batch tile: whole lane-padded batch if small, capped for big B.
    # Always a multiple of 128 (lane width).
    tb = min(pl.cdiv(B, 128) * 128, max_tb)
    b_pad = pl.cdiv(B, tb) * tb

    # Augmented, transposed input (in+1, b_pad): last row = ones -> folds b1
    # into the first matmul.  jnp.pad / concatenate fuse under jit, no extra
    # standalone HBM materialization like the old zeros+scatter.
    xa = jnp.concatenate([x, jnp.ones((B, 1), x.dtype)], axis=1)          # (B, in+1)
    xTa = jnp.pad(xa.T, ((0, 0), (0, b_pad - B)))                         # (in+1, b_pad)
    w1a = jnp.concatenate([w1, b1.reshape(hidden, 1)], axis=1).astype(x.dtype)  # (hidden, in+1)
    b2c = b2.reshape(out_size, 1).astype(x.dtype)

    outT = pl.pallas_call(
        _mlp_kernel,
        out_shape=jax.ShapeDtypeStruct((out_size, b_pad), x.dtype),
        grid=(b_pad // tb,),
        in_specs=[
            pl.BlockSpec((in_size + 1, tb), lambda i: (0, i)),       # x^T+ones batch tile
            pl.BlockSpec((hidden, in_size + 1), lambda i: (0, 0)),   # [W1 | b1] (resident)
            pl.BlockSpec((out_size, hidden), lambda i: (0, 0)),      # W2 (resident)
            pl.BlockSpec((out_size, 1), lambda i: (0, 0)),           # b2 (resident)
        ],
        out_specs=pl.BlockSpec((out_size, tb), lambda i: (0, i)),    # lane-dense output
        compiler_params=pltpu.CompilerParams(
            dimension_semantics=("parallel",),                       # megacore on v7x
        ),
    )(xTa, w1a, w2, b2c)

    # Back to the PyTorch-facing (B, out) layout, dropping padding.
    return outT[:, :B].T


def init_params(key, in_size, hidden_size, out_size):
    """Deterministic init mimicking nn.Linear's U(-1/sqrt(fan_in), 1/sqrt(fan_in)).

    Weights kept in PyTorch layout: W1 (hidden, in), W2 (out, hidden)."""
    k1, k2, k3, k4 = jax.random.split(key, 4)
    bound1 = 1.0 / (in_size ** 0.5)
    bound2 = 1.0 / (hidden_size ** 0.5)
    w1 = jax.random.uniform(k1, (hidden_size, in_size), jnp.float32, -bound1, bound1)
    b1 = jax.random.uniform(k2, (hidden_size,), jnp.float32, -bound1, bound1)
    w2 = jax.random.uniform(k3, (out_size, hidden_size), jnp.float32, -bound2, bound2)
    b2 = jax.random.uniform(k4, (out_size,), jnp.float32, -bound2, bound2)
    return w1, b1, w2, b2


if __name__ == "__main__":
    # 1-hidden-layer MLP; batch of collocation points (lane-dense), with a
    # non-multiple-of-128 batch to exercise the padding path.
    batch, in_size, hidden_size, out_size = 200, 2, 32, 1

    key = jax.random.PRNGKey(0)
    kx, kp = jax.random.split(key)
    x = jax.random.normal(kx, (batch, in_size), jnp.float32)
    w1, b1, w2, b2 = init_params(kp, in_size, hidden_size, out_size)

    out = nn_forward(x, w1, b1, w2, b2)
    out = jax.block_until_ready(out)

    # Pure-JAX reference of the same semantics (PyTorch Linear: y = x @ W^T + b).
    ref = jax.nn.sigmoid(x @ w1.T + b1) @ w2.T + b2
    assert out.shape == (batch, out_size)
    assert jnp.allclose(out, ref, atol=1e-5, rtol=1e-5)

    print("KERNEL_OK")
</pallas_src>

<mosaic_0001>
module attributes {stable_mosaic.version = 11 : i64} {
  func.func @_mlp_kernel(%arg0: i32, %arg1: memref<3x256xf32, #tpu.memory_space<vmem>>, %arg2: memref<32x3xf32, #tpu.memory_space<vmem>>, %arg3: memref<1x32xf32, #tpu.memory_space<vmem>>, %arg4: memref<1x1xf32, #tpu.memory_space<vmem>>, %arg5: memref<1x256xf32, #tpu.memory_space<vmem>>) attributes {dimension_semantics = [#tpu.dimension_semantics<parallel>], iteration_bounds = array<i64: 1>, scalar_prefetch = 0 : i64, scratch_operands = 0 : i64, tpu.core_type = #tpu.core_type<tc>, window_params = [{transform_indices = @transform_0, window_bounds = array<i64: 3, 256>}, {pipeline_mode = #tpu.pipeline_mode<synchronous>, transform_indices = @transform_1, window_bounds = array<i64: 32, 3>}, {pipeline_mode = #tpu.pipeline_mode<synchronous>, transform_indices = @transform_2, window_bounds = array<i64: 1, 32>}, {pipeline_mode = #tpu.pipeline_mode<synchronous>, transform_indices = @transform_3, window_bounds = array<i64: 1, 1>}, {transform_indices = @transform_4, window_bounds = array<i64: 1, 256>}]} {
    %c0 = arith.constant 0 : index
    %c0_0 = arith.constant 0 : index
    %0 = vector.load %arg2[%c0, %c0_0] : memref<32x3xf32, #tpu.memory_space<vmem>>, vector<32x3xf32>
    %c0_1 = arith.constant 0 : index
    %c0_2 = arith.constant 0 : index
    %1 = vector.load %arg1[%c0_1, %c0_2] : memref<3x256xf32, #tpu.memory_space<vmem>>, vector<3x256xf32>
    %cst = arith.constant dense<0.000000e+00> : vector<32x256xf32>
    %2 = tpu.matmul %0, %1, %cst {dimension_numbers = #tpu.dot_dimension_numbers<[1], [0], [0], [1], [0, 0, 1, 1], [], []>} : vector<32x3xf32>, vector<3x256xf32>, vector<32x256xf32> -> vector<32x256xf32>
    %3 = arith.negf %2 : vector<32x256xf32>
    %4 = math.exp %3 : vector<32x256xf32>
    %cst_3 = arith.constant 1.000000e+00 : f32
    %5 = vector.broadcast %cst_3 : f32 to vector<32x256xf32>
    %6 = arith.addf %5, %4 : vector<32x256xf32>
    %7 = arith.divf %5, %6 : vector<32x256xf32>
    %c0_4 = arith.constant 0 : index
    %c0_5 = arith.constant 0 : index
    %8 = vector.load %arg3[%c0_4, %c0_5] : memref<1x32xf32, #tpu.memory_space<vmem>>, vector<1x32xf32>
    %cst_6 = arith.constant dense<0.000000e+00> : vector<1x256xf32>
    %9 = tpu.matmul %8, %7, %cst_6 {dimension_numbers = #tpu.dot_dimension_numbers<[1], [0], [0], [1], [0, 0, 1, 1], [], []>} : vector<1x32xf32>, vector<32x256xf32>, vector<1x256xf32> -> vector<1x256xf32>
    %c0_7 = arith.constant 0 : index
    %c0_8 = arith.constant 0 : index
    %10 = vector.load %arg4[%c0_7, %c0_8] : memref<1x1xf32, #tpu.memory_space<vmem>>, vector<1x1xf32>
    %11 = vector.broadcast %10 : vector<1x1xf32> to vector<1x256xf32>
    %12 = arith.addf %9, %11 : vector<1x256xf32>
    %c0_9 = arith.constant 0 : index
    %c0_10 = arith.constant 0 : index
    %13 = vector.load %arg5[%c0_9, %c0_10] : memref<1x256xf32, #tpu.memory_space<vmem>>, vector<1x256xf32>
    tpu.vector_store %arg5[%c0_9, %c0_10], %12 {strides = array<i32>} : memref<1x256xf32, #tpu.memory_space<vmem>>, vector<1x256xf32>,
    return
  }
  func.func @transform_0(%arg0: i32) -> (i32, i32) {
    %c0_i32 = arith.constant 0 : i32
    %c0_i32_0 = arith.constant 0 : i32
    return %c0_i32, %arg0 : i32, i32
  }
  func.func @transform_1(%arg0: i32) -> (i32, i32) {
    %c0_i32 = arith.constant 0 : i32
    %c0_i32_0 = arith.constant 0 : i32
    %c0_i32_1 = arith.constant 0 : i32
    return %c0_i32, %c0_i32_0 : i32, i32
  }
  func.func @transform_2(%arg0: i32) -> (i32, i32) {
    %c0_i32 = arith.constant 0 : i32
    %c0_i32_0 = arith.constant 0 : i32
    %c0_i32_1 = arith.constant 0 : i32
    return %c0_i32, %c0_i32_0 : i32, i32
  }
  func.func @transform_3(%arg0: i32) -> (i32, i32) {
    %c0_i32 = arith.constant 0 : i32
    %c0_i32_0 = arith.constant 0 : i32
    %c0_i32_1 = arith.constant 0 : i32
    return %c0_i32, %c0_i32_0 : i32, i32
  }
  func.func @transform_4(%arg0: i32) -> (i32, i32) {
    %c0_i32 = arith.constant 0 : i32
    %c0_i32_0 = arith.constant 0 : i32
    return %c0_i32, %arg0 : i32, i32
  }
}

</mosaic_0001>

<llo_original>
// kernel: nn_forward.1
$region0: #{nn_forward.1}
  #allocation0 [shape = 'u32[]', space=smem, size = 0x4, offset = 0x4, fixed_abs, tag = 'smem constant byte address 0x4 - core index']
  #allocation1 [shape = 'u32[144,128]{1,0:T(1,128)}', space=vmem, size = 0x12000, scoped, tag = 'internal scratch']
  #allocation2 [shape = 'f32[1,1]{1,0:T(1,128)S(1)}', space=vmem, size = 0x200, scoped, tag = 'scoped memory for nn_forward.1']
  %s0 = inlined_call_operand.vmem [shape: f32[3,256], index: 0, kind: input, shape index: {}]
  %s1 = inlined_call_operand.vmem [shape: f32[32,3], index: 1, kind: input, shape index: {}]
  %s2 = inlined_call_operand.vmem [shape: f32[1,32], index: 2, kind: input, shape index: {}]
  %s3 = inlined_call_operand.<no memory space> [shape: f32[1,1], index: 3, kind: input, shape index: {}]
  %s4 = inlined_call_operand.vmem [shape: f32[1,256], index: 4, kind: output, shape index: {}]
  %s5 = sld [smem:[#allocation0]]
  $region26: #{nn_forward.1} parent=0
    _
  %s7 = ssub.s32 1, %s5
  %s8 = scalar_select 0, %s7, %s5
  %v9 = vstv %s3
  %10 = vst [vmem:[#allocation2] sm:$0x1] %v9
  // Predicated region
  $region2: #{nn_forward.1} parent=0 // pred_check
    _
  $region3: #{nn_forward.1} parent=0 // pred_check_branch
    %12 = sbr.rel (0) target = $region5
  $region4: #{nn_forward.1} parent=0 // pred_region
    _
  $region5: #{nn_forward.1} parent=0 // pred_fallthru
    _
  // Predicated region
  $region6: #{nn_forward.1} parent=0 // pred_check
    _
  $region7: #{nn_forward.1} parent=0 // pred_check_branch
    %14 = sbr.rel (0) target = $region9
  $region8: #{nn_forward.1} parent=0 // pred_region
    _
  $region9: #{nn_forward.1} parent=0 // pred_fallthru
    _
  // Predicated region
  $region10: #{nn_forward.1} parent=0 // pred_check
    _
  $region11: #{nn_forward.1} parent=0 // pred_check_branch
    %16 = sbr.rel (0) target = $region13
  $region12: #{nn_forward.1} parent=0 // pred_region
    _
  $region13: #{nn_forward.1} parent=0 // pred_fallthru
    _
  // Predicated region
  $region14: #{nn_forward.1} parent=0 // pred_check
    _
  $region15: #{nn_forward.1} parent=0 // pred_check_branch
    %18 = sbr.rel (0) target = $region17
  $region16: #{nn_forward.1} parent=0 // pred_region
    _
  $region17: #{nn_forward.1} parent=0 // pred_fallthru
    _
  %v19 = vld [vmem:[%s1] sm:$0xff]
  %v20 = vld [vmem:[%s1 + $0x8] sm:$0xff]
  %v21 = vld [vmem:[%s1 + $0x10] sm:$0xff]
  %v22 = vld [vmem:[%s1 + $0x18] sm:$0xff]
  %v23 = vld [vmem:[%s0] sm:$0x77]
  %v25 = vcombine.high %v23, %v23
  %vm26 = vcmask 23552
  %v28 = vsel %vm26, %v19, 0
  %v31 = vsel %vm26, %v20, 0
  %v34 = vsel %vm26, %v21, 0
  %v37 = vsel %vm26, %v22, 0
  %vm39 = vcmask 1042432
  %v40 = vsel %vm39, %v23, 0
  %v42 = vsel %vm39, %v25, 0
  %44 = vmatprep.subr.mxu0 %v42
  %45 = vmatpush1.msra.mxu0 %v40
  %46 = vmatprep.subr.mxu0 0.0
  %47 = vmatpush1.msra.mxu0 0.0
  %48 = vmatprep.subr.mxu0 0.0
  %49 = vmatpush1.msra.mxu0 0.0
  %50 = vmatprep.subr.mxu0 0.0
  %51 = vmatpush1.msra.mxu0 0.0
  %52 = vmatprep.subr.mxu0 0.0
  %53 = vmatpush1.msra.mxu0 0.0
  %54 = vmatprep.subr.mxu0 0.0
  %55 = vmatpush1.msra.mxu0 0.0
  %56 = vmatprep.subr.mxu0 0.0
  %57 = vmatpush1.msra.mxu0 0.0
  %58 = vmatprep.subr.mxu0 0.0
  %59 = vmatpush1.msra.mxu0 0.0
  %60 = vmatprep.subr.mxu0 0.0
  %61 = vmatpush1.msra.mxu0 0.0
  %62 = vmatprep.subr.mxu0 0.0
  %63 = vmatpush1.msra.mxu0 0.0
  %64 = vmatprep.subr.mxu0 0.0
  %65 = vmatpush1.msra.mxu0 0.0
  %66 = vmatprep.subr.mxu0 0.0
  %67 = vmatpush1.msra.mxu0 0.0
  %68 = vmatprep.subr.mxu0 0.0
  %69 = vmatpush1.msra.mxu0 0.0
  %70 = vmatprep.subr.mxu0 0.0
  %71 = vmatpush1.msra.mxu0 0.0
  %72 = vmatprep.subr.mxu0 0.0
  %73 = vmatpush1.msra.mxu0 0.0
  %74 = vmatprep.subr.mxu0 0.0
  %75 = vmatpush1.msra.mxu0 0.0
  %76 = vmatprep.subr.mxu0 0.0
  %77 = vmatpush1.msra.mxu0 0.0
  %78 = vmatprep.subr.mxu0 0.0
  %79 = vmatpush1.msra.mxu0 0.0
  %80 = vmatprep.subr.mxu0 0.0
  %81 = vmatpush1.msra.mxu0 0.0
  %82 = vmatprep.subr.mxu0 0.0
  %83 = vmatpush1.msra.mxu0 0.0
  %84 = vmatprep.subr.mxu0 0.0
  %85 = vmatpush1.msra.mxu0 0.0
  %86 = vmatprep.subr.mxu0 0.0
  %87 = vmatpush1.msra.mxu0 0.0
  %88 = vmatprep.subr.mxu0 0.0
  %89 = vmatpush1.msra.mxu0 0.0
  %90 = vmatprep.subr.mxu0 0.0
  %91 = vmatpush1.msra.mxu0 0.0
  %92 = vmatprep.subr.mxu0 0.0
  %93 = vmatpush1.msra.mxu0 0.0
  %94 = vmatprep.subr.mxu0 0.0
  %95 = vmatpush1.msra.mxu0 0.0
  %96 = vmatprep.subr.mxu0 0.0
  %97 = vmatpush1.msra.mxu0 0.0
  %98 = vmatprep.subr.mxu0 0.0
  %99 = vmatpush1.msra.mxu0 0.0
  %100 = vmatprep.subr.mxu0 0.0
  %101 = vmatpush1.msra.mxu0 0.0
  %102 = vmatprep.subr.mxu0 0.0
  %103 = vmatpush1.msra.mxu0 0.0
  %104 = vmatprep.subr.mxu0 0.0
  %105 = vmatpush1.msra.mxu0 0.0
  %106 = vmatprep.subr.mxu0 0.0
  %107 = vmatpush1.msra.mxu0 0.0
  %108 = vmatprep.mubr.f32.mxu0 0.0
  %109 = vmatmul.mubr.f32.gmra.mrb[0].mxu0 %v28
  %v110 = vpop.f32.mrb[0].mxu0
  %v111 = vadd.f32 0.0, %v110
  %v112 = vpop.f32.mrb[0].mxu0
  %v113 = vadd.f32 0.0, %v112
  %114 = vmatprep.mubr.f32.mxu0 0.0
  %115 = vmatmul.mubr.f32.gmra.mrb[0].mxu0 %v31
  %v116 = vpop.f32.mrb[0].mxu0
  %v117 = vadd.f32 0.0, %v116
  %v118 = vpop.f32.mrb[0].mxu0
  %v119 = vadd.f32 0.0, %v118
  %120 = vmatprep.mubr.f32.mxu0 0.0
  %121 = vmatmul.mubr.f32.gmra.mrb[0].mxu0 %v34
  %v122 = vpop.f32.mrb[0].mxu0
  %v123 = vadd.f32 0.0, %v122
  %v124 = vpop.f32.mrb[0].mxu0
  %v125 = vadd.f32 0.0, %v124
  %126 = vmatprep.mubr.f32.mxu0 0.0
  %127 = vmatmul.mubr.f32.gmra.mrb[0].mxu0 %v37
  %v128 = vpop.f32.mrb[0].mxu0
  %v129 = vadd.f32 0.0, %v128
  %v130 = vpop.f32.mrb[0].mxu0
  %v131 = vadd.f32 0.0, %v130
  %132 = vdwg.mxu0
  %v133 = vxor.u32 %v111, 2147483648
  %v134 = vxor.u32 %v113, 2147483648
  %v135 = vxor.u32 %v117, 2147483648
  %v136 = vxor.u32 %v119, 2147483648
  %v137 = vxor.u32 %v123, 2147483648
  %v138 = vxor.u32 %v125, 2147483648
  %v139 = vxor.u32 %v129, 2147483648
  %v140 = vxor.u32 %v131, 2147483648
  %v141 = vmul.f32 %v133, 1.442695
  %v142 = vpow.pop %v141
  %v143 = vmul.f32 %v134, 1.442695
  %v144 = vpow.pop %v143
  %v145 = vmul.f32 %v135, 1.442695
  %v146 = vpow.pop %v145
  %v147 = vmul.f32 %v136, 1.442695
  %v148 = vpow.pop %v147
  %v149 = vmul.f32 %v137, 1.442695
  %v150 = vpow.pop %v149
  %v151 = vmul.f32 %v138, 1.442695
  %v152 = vpow.pop %v151
  %v153 = vmul.f32 %v139, 1.442695
  %v154 = vpow.pop %v153
  %v155 = vmul.f32 %v140, 1.442695
  %v156 = vpow.pop %v155
  %v157 = vadd.f32 %v142, 1.0
  %v158 = vadd.f32 %v144, 1.0
  %v159 = vadd.f32 %v146, 1.0
  %v160 = vadd.f32 %v148, 1.0
  %v161 = vadd.f32 %v150, 1.0
  %v162 = vadd.f32 %v152, 1.0
  %v163 = vadd.f32 %v154, 1.0
  %v164 = vadd.f32 %v156, 1.0
  %v165 = vrcp.pop %v157
  %v166 = vmul.f32 1.0, %v165
  %v167 = vrcp.pop %v158
  %v168 = vmul.f32 1.0, %v167
  %v169 = vrcp.pop %v159
  %v170 = vmul.f32 1.0, %v169
  %v171 = vrcp.pop %v160
  %v172 = vmul.f32 1.0, %v171
  %v173 = vrcp.pop %v161
  %v174 = vmul.f32 1.0, %v173
  %v175 = vrcp.pop %v162
  %v176 = vmul.f32 1.0, %v175
  %v177 = vrcp.pop %v163
  %v178 = vmul.f32 1.0, %v177
  %v179 = vrcp.pop %v164
  %v180 = vmul.f32 1.0, %v179
  %v181 = vld [vmem:[%s2] sm:$0x1]
  %v182 = vld [vmem:[#allocation2] sm:$0x1]
  %184 = vset.pattern.permute.xlu0 0
  %185 = vperm.xlu0 %184, %v182
  %v186 = vpop.permute.xlu0 %185
  %v188 = vlaneseq
  %v189 = vshrl.u32 %v188, 7
  %v190 = vsub.s32 0, %v189
  %v191 = vrot.slane %v186, %v190
  %vm192 = vcmask 261120
  %v194 = vsel %vm192, %v181, 0
  %196 = vmatprep.subr.mxu0 %v168
  %197 = vmatpush1.msra.mxu0 %v166
  %198 = vmatprep.subr.mxu0 %v172
  %199 = vmatpush1.msra.mxu0 %v170
  %200 = vmatprep.subr.mxu0 %v176
  %201 = vmatpush1.msra.mxu0 %v174
  %202 = vmatprep.subr.mxu0 %v180
  %203 = vmatpush1.msra.mxu0 %v178
  %204 = vmatprep.subr.mxu0 0.0
  %205 = vmatpush1.msra.mxu0 0.0
  %206 = vmatprep.subr.mxu0 0.0
  %207 = vmatpush1.msra.mxu0 0.0
  %208 = vmatprep.subr.mxu0 0.0
  %209 = vmatpush1.msra.mxu0 0.0
  %210 = vmatprep.subr.mxu0 0.0
  %211 = vmatpush1.msra.mxu0 0.0
  %212 = vmatprep.subr.mxu0 0.0
  %213 = vmatpush1.msra.mxu0 0.0
  %214 = vmatprep.subr.mxu0 0.0
  %215 = vmatpush1.msra.mxu0 0.0
  %216 = vmatprep.subr.mxu0 0.0
  %217 = vmatpush1.msra.mxu0 0.0
  %218 = vmatprep.subr.mxu0 0.0
  %219 = vmatpush1.msra.mxu0 0.0
  %220 = vmatprep.subr.mxu0 0.0
  %221 = vmatpush1.msra.mxu0 0.0
  %222 = vmatprep.subr.mxu0 0.0
  %223 = vmatpush1.msra.mxu0 0.0
  %224 = vmatprep.subr.mxu0 0.0
  %225 = vmatpush1.msra.mxu0 0.0
  %226 = vmatprep.subr.mxu0 0.0
  %227 = vmatpush1.msra.mxu0 0.0
  %228 = vmatprep.subr.mxu0 0.0
  %229 = vmatpush1.msra.mxu0 0.0
  %230 = vmatprep.subr.mxu0 0.0
  %231 = vmatpush1.msra.mxu0 0.0
  %232 = vmatprep.subr.mxu0 0.0
  %233 = vmatpush1.msra.mxu0 0.0
  %234 = vmatprep.subr.mxu0 0.0
  %235 = vmatpush1.msra.mxu0 0.0
  %236 = vmatprep.subr.mxu0 0.0
  %237 = vmatpush1.msra.mxu0 0.0
  %238 = vmatprep.subr.mxu0 0.0
  %239 = vmatpush1.msra.mxu0 0.0
  %240 = vmatprep.subr.mxu0 0.0
  %241 = vmatpush1.msra.mxu0 0.0
  %242 = vmatprep.subr.mxu0 0.0
  %243 = vmatpush1.msra.mxu0 0.0
  %244 = vmatprep.subr.mxu0 0.0
  %245 = vmatpush1.msra.mxu0 0.0
  %246 = vmatprep.subr.mxu0 0.0
  %247 = vmatpush1.msra.mxu0 0.0
  %248 = vmatprep.subr.mxu0 0.0
  %249 = vmatpush1.msra.mxu0 0.0
  %250 = vmatprep.subr.mxu0 0.0
  %251 = vmatpush1.msra.mxu0 0.0
  %252 = vmatprep.subr.mxu0 0.0
  %253 = vmatpush1.msra.mxu0 0.0
  %254 = vmatprep.subr.mxu0 0.0
  %255 = vmatpush1.msra.mxu0 0.0
  %256 = vmatprep.subr.mxu0 0.0
  %257 = vmatpush1.msra.mxu0 0.0
  %258 = vmatprep.subr.mxu0 0.0
  %259 = vmatpush1.msra.mxu0 0.0
  %260 = vmatprep.mubr.f32.mxu0 0.0
  %261 = vmatmul.mubr.f32.gmra.mrb[0].mxu0 %v194
  %v262 = vpop.f32.mrb[0].mxu0
  %v263 = vadd.f32 %v191, %v262
  %v264 = vpop.f32.mrb[0].mxu0
  %v265 = vadd.f32 %v191, %v264
  %266 = vdwg.mxu0
  %v269 = vcombine.low %v263, %v265
  %v271 = vunpack.c.l.s4 1966171168
  %v272 = vunpack.c.0.s8 %v271
  %v273 = vlaneseq
  %v274 = vshrl.u32 %v273, 7
  %v275 = vsub.s32 %v272, %v274
  %v276 = vrot.slane %v269, %v275
  %v278 = vunpack.c.l.s4 1966171168
  %v279 = vunpack.c.0.s8 %v278
  %v280 = vlaneseq
  %v281 = vshrl.u32 %v280, 7
  %v282 = vsub.s32 %v279, %v281
  %v283 = vrot.slane %v276, %v282
  %v285 = vlaneseq
  %vm286 = vcmp.ge.s32.totalorder %v285, 0
  %vm287 = vcmp.lt.s32.totalorder %v285, 256
  %vm288 = vmand %vm286, %vm287
  %289 = vst.msk [vmem:[%s4] sm:$0x3] %vm288, %v283
  // Predicated region
  $region18: #{nn_forward.1} parent=0 // pred_check
    _
  $region19: #{nn_forward.1} parent=0 // pred_check_branch
    %291 = sbr.rel (0) target = $region21
  $region20: #{nn_forward.1} parent=0 // pred_region
    _
  $region21: #{nn_forward.1} parent=0 // pred_fallthru
    _
  // Predicated region
  $region22: #{nn_forward.1} parent=0 // pred_check
    _
  $region23: #{nn_forward.1} parent=0 // pred_check_branch
    %293 = sbr.rel (0) target = $region25
  $region24: #{nn_forward.1} parent=0 // pred_region
    _
  $region25: #{nn_forward.1} parent=0 // pred_fallthru
    _

</llo_original>
